<compile_context>
chip_gen: v7x
topology: tpu7x:2x2x1
jax: 0.10.0
libtpu: 0.0.40
codegen_flags: <defaults>
</compile_context>

<pallas_src>
import functools

import jax
import jax.numpy as jnp
from jax.experimental import pallas as pl
from jax.experimental.pallas import tpu as pltpu


def _round_up(x: int, m: int) -> int:
    return ((x + m - 1) // m) * m


def _choose_tb(B: int, tb_max: int = 128) -> int:
    tb = min(tb_max, _round_up(B, 16))
    # v7x shards the "parallel" batch axis over 2 TensorCores; prefer >= 2
    # batch programs whenever the batch is big enough to split (16-row
    # alignment keeps the bf16 counts sublane-packed).
    if B > 16 and _round_up(B, tb) // tb < 2:
        tb = _round_up((B + 1) // 2, 16)
    return tb


def cbow_kernel(x_ref, emb_ref, out_ref, *, inv_c, n_vocab_steps):
    # x_ref   : (TB, C)     int32 VMEM  context indices for this batch tile
    # emb_ref : (TV, E_pad) bf16  VMEM  one vocab tile of the embedding table
    # out_ref : (TB, E_pad) f32   VMEM  output tile (resident along the V axis)
    idx = x_ref[...]                      # (TB, C) int32
    tb, C = idx.shape
    tv = emb_ref.shape[0]

    # (1, TV) local column ids: only ~2 vregs live through the counts build
    # (a (TB, TV) iota would blow the 64-vreg file and force spills).
    col = jax.lax.broadcasted_iota(jnp.int32, (1, tv), 1)
    if n_vocab_steps > 1:
        col = col + pl.program_id(1) * tv

    # counts[b, v] = # of times vocab id v (global) appears in row b of x.
    # C is tiny -> static unroll; pure VPU compares + adds.
    counts = jnp.zeros((tb, tv), jnp.float32)
    for c in range(C):
        counts += (idx[:, c:c + 1] == col).astype(jnp.float32)

    # counts <= C are exact in bf16; bf16 x bf16 rides the full-rate MXU path
    # with f32 accumulation.  1/C scaling is deferred to the (TB, E) output.
    partial = jnp.dot(
        counts.astype(jnp.bfloat16),
        emb_ref[...],
        preferred_element_type=jnp.float32,
    )

    if n_vocab_steps == 1:
        # Whole table in one step: no accumulator pattern needed at all.
        out_ref[...] = partial * inv_c
    else:
        k = pl.program_id(1)

        @pl.when(k == 0)
        def _init():
            out_ref[...] = jnp.zeros_like(out_ref)

        # out block index is constant along k -> VMEM-resident accumulator.
        out_ref[...] += partial

        @pl.when(k == n_vocab_steps - 1)
        def _finalize():
            out_ref[...] = out_ref[...] * inv_c

    # Note: the PyTorch forward also computes self.embedding(y) but never uses
    # it in the returned value, so it is dead code and omitted here.


def cbow_ngs_forward(x_idx, y_idx, emb_table):
    """CBOW_ngs.forward: mean over context of embedding(x); y is ignored.

    x_idx: (B, C) integer indices, y_idx: (B,) integer indices (dead code in
    the reference forward), emb_table: (V, E) float32 embedding weights.
    """
    del y_idx  # embedded-but-discarded in the reference forward
    B, C = x_idx.shape
    V, E = emb_table.shape

    e_pad = _round_up(E, 128)
    tb = _choose_tb(B)
    b_pad = _round_up(B, tb)

    # Vocab tiling: collapse to one step when the bf16 table fits comfortably
    # in VMEM (double-buffered table block + out tile stay far below the
    # 32 MiB scoped limit, which also holds on v7x's 64 MiB physical VMEM).
    table_bytes = _round_up(V, 128) * e_pad * 2  # bf16
    if table_bytes <= 4 * 1024 * 1024:
        tv = _round_up(V, 128)
    else:
        tv = 512  # stream the table as (512, e_pad) bf16 tiles
    v_pad = _round_up(V, tv)
    n_vocab_steps = v_pad // tv

    # Pad only when needed (a pad copy of the table would cost more HBM
    # traffic than the kernel itself moves at aligned shapes).
    if B == b_pad and x_idx.dtype == jnp.int32:
        x_p = x_idx
    else:
        x_p = jnp.zeros((b_pad, C), jnp.int32).at[:B].set(x_idx.astype(jnp.int32))

    if V == v_pad and E == e_pad:
        emb_p = emb_table.astype(jnp.bfloat16)
    else:
        # Explicit zero padding: padded vocab ids never match any count, and
        # zero rows keep 0-count columns from poisoning the f32 accumulation.
        emb_p = jnp.zeros((v_pad, e_pad), jnp.bfloat16).at[:V, :E].set(
            emb_table.astype(jnp.bfloat16))

    if n_vocab_steps > 1:
        # Deeper pipelining on the dominant table stream hides exposed DMA
        # latency (matters most on v5e's lower HBM bandwidth).
        emb_spec = pl.BlockSpec((tv, e_pad), lambda i, k: (k, 0),
                                pipeline_mode=pl.Buffered(3))
    else:
        emb_spec = pl.BlockSpec((tv, e_pad), lambda i, k: (k, 0))

    grid = (b_pad // tb, n_vocab_steps)

    out = pl.pallas_call(
        functools.partial(cbow_kernel, inv_c=1.0 / C,
                          n_vocab_steps=n_vocab_steps),
        out_shape=jax.ShapeDtypeStruct((b_pad, e_pad), jnp.float32),
        grid_spec=pltpu.PrefetchScalarGridSpec(
            num_scalar_prefetch=0,
            grid=grid,
            in_specs=[
                pl.BlockSpec((tb, C), lambda i, k: (i, 0)),   # indices
                emb_spec,                                     # table tile
            ],
            out_specs=pl.BlockSpec((tb, e_pad), lambda i, k: (i, 0)),
        ),
        compiler_params=pltpu.CompilerParams(
            # Batch tiles shard across TensorCores; vocab axis is a reduction.
            dimension_semantics=("parallel", "arbitrary"),
            vmem_limit_bytes=32 * 1024 * 1024,
        ),
    )(x_p, emb_p)

    if b_pad == B and e_pad == E:
        return out
    return out[:B, :E]


if __name__ == "__main__":
    VOCAB = 512      # vocab_size
    N_EMBED = 128    # embedding dim (lane-aligned)
    B = 16           # batch
    C = 4            # context window size

    key = jax.random.PRNGKey(0)
    k_emb, k_x, k_y = jax.random.split(key, 3)

    # Deterministic "nn.Embedding" weight (synthetic, not a checkpoint).
    emb_table = jax.random.normal(k_emb, (VOCAB, N_EMBED), jnp.float32) * 0.1

    x_idx = jax.random.randint(k_x, (B, C), 0, VOCAB, dtype=jnp.int32)
    y_idx = jax.random.randint(k_y, (B,), 0, VOCAB, dtype=jnp.int32)

    out = cbow_ngs_forward(x_idx, y_idx, emb_table)
    out = jax.block_until_ready(out)
    assert out.shape == (B, N_EMBED)

    # Tight check: reference with the same bf16 weight quantization as the MXU
    # path (counts are exact, accumulation is f32 on both sides).
    emb_q = emb_table.astype(jnp.bfloat16).astype(jnp.float32)
    ref_q = jnp.take(emb_q, x_idx, axis=0).mean(axis=1)
    assert jnp.allclose(out, ref_q, atol=1e-5), "mismatch vs bf16-quantized reference"

    # Sanity check vs full-f32 PyTorch-semantics reference (bf16 weight tolerance).
    ref = jnp.take(emb_table, x_idx, axis=0).mean(axis=1)
    assert jnp.allclose(out, ref, atol=1e-2, rtol=1e-2), "mismatch vs f32 reference"

    print("KERNEL_OK")
</pallas_src>

<mosaic_0001>
module attributes {stable_mosaic.version = 11 : i64} {
  func.func @cbow_kernel(%arg0: i32, %arg1: i32, %arg2: memref<16x4xi32, #tpu.memory_space<vmem>>, %arg3: memref<512x128xbf16, #tpu.memory_space<vmem>>, %arg4: memref<16x128xf32, #tpu.memory_space<vmem>>) attributes {dimension_semantics = [#tpu.dimension_semantics<parallel>, #tpu.dimension_semantics<arbitrary>], iteration_bounds = array<i64: 1, 1>, scalar_prefetch = 0 : i64, scratch_operands = 0 : i64, tpu.core_type = #tpu.core_type<tc>, window_params = [{transform_indices = @transform_0, window_bounds = array<i64: 16, 4>}, {transform_indices = @transform_1, window_bounds = array<i64: 512, 128>}, {transform_indices = @transform_2, window_bounds = array<i64: 16, 128>}]} {
    %c0 = arith.constant 0 : index
    %c0_0 = arith.constant 0 : index
    %0 = vector.load %arg2[%c0, %c0_0] : memref<16x4xi32, #tpu.memory_space<vmem>>, vector<16x4xi32>
    %1 = tpu.iota {dimensions = array<i32: 1>} : vector<1x512xi32>
    %cst = arith.constant 0.000000e+00 : f32
    %2 = vector.broadcast %cst : f32 to vector<16x512xf32>
    %3 = vector.extract_strided_slice %0 {offsets = [0, 0], sizes = [16, 1], strides = [1, 1]} : vector<16x4xi32> to vector<16x1xi32>
    %4 = vector.broadcast %3 : vector<16x1xi32> to vector<16x512xi32>
    %5 = vector.broadcast %1 : vector<1x512xi32> to vector<16x512xi32>
    %6 = arith.cmpi eq, %4, %5 : vector<16x512xi32>
    %7 = arith.extui %6 : vector<16x512xi1> to vector<16x512xi32>
    %8 = arith.sitofp %7 : vector<16x512xi32> to vector<16x512xf32>
    %9 = arith.addf %2, %8 : vector<16x512xf32>
    %10 = vector.extract_strided_slice %0 {offsets = [0, 1], sizes = [16, 1], strides = [1, 1]} : vector<16x4xi32> to vector<16x1xi32>
    %11 = vector.broadcast %10 : vector<16x1xi32> to vector<16x512xi32>
    %12 = vector.broadcast %1 : vector<1x512xi32> to vector<16x512xi32>
    %13 = arith.cmpi eq, %11, %12 : vector<16x512xi32>
    %14 = arith.extui %13 : vector<16x512xi1> to vector<16x512xi32>
    %15 = arith.sitofp %14 : vector<16x512xi32> to vector<16x512xf32>
    %16 = arith.addf %9, %15 : vector<16x512xf32>
    %17 = vector.extract_strided_slice %0 {offsets = [0, 2], sizes = [16, 1], strides = [1, 1]} : vector<16x4xi32> to vector<16x1xi32>
    %18 = vector.broadcast %17 : vector<16x1xi32> to vector<16x512xi32>
    %19 = vector.broadcast %1 : vector<1x512xi32> to vector<16x512xi32>
    %20 = arith.cmpi eq, %18, %19 : vector<16x512xi32>
    %21 = arith.extui %20 : vector<16x512xi1> to vector<16x512xi32>
    %22 = arith.sitofp %21 : vector<16x512xi32> to vector<16x512xf32>
    %23 = arith.addf %16, %22 : vector<16x512xf32>
    %24 = vector.extract_strided_slice %0 {offsets = [0, 3], sizes = [16, 1], strides = [1, 1]} : vector<16x4xi32> to vector<16x1xi32>
    %25 = vector.broadcast %24 : vector<16x1xi32> to vector<16x512xi32>
    %26 = vector.broadcast %1 : vector<1x512xi32> to vector<16x512xi32>
    %27 = arith.cmpi eq, %25, %26 : vector<16x512xi32>
    %28 = arith.extui %27 : vector<16x512xi1> to vector<16x512xi32>
    %29 = arith.sitofp %28 : vector<16x512xi32> to vector<16x512xf32>
    %30 = arith.addf %23, %29 : vector<16x512xf32>
    %31 = arith.truncf %30 : vector<16x512xf32> to vector<16x512xbf16>
    %c0_1 = arith.constant 0 : index
    %c0_2 = arith.constant 0 : index
    %32 = vector.load %arg3[%c0_1, %c0_2] : memref<512x128xbf16, #tpu.memory_space<vmem>>, vector<512x128xbf16>
    %cst_3 = arith.constant dense<0.000000e+00> : vector<16x128xf32>
    %33 = tpu.matmul %31, %32, %cst_3 {dimension_numbers = #tpu.dot_dimension_numbers<[1], [0], [0], [1], [0, 0, 1, 1], [], []>} : vector<16x512xbf16>, vector<512x128xbf16>, vector<16x128xf32> -> vector<16x128xf32>
    %cst_4 = arith.constant 2.500000e-01 : f32
    %34 = vector.broadcast %cst_4 : f32 to vector<16x128xf32>
    %35 = arith.mulf %33, %34 : vector<16x128xf32>
    %c0_5 = arith.constant 0 : index
    %c0_6 = arith.constant 0 : index
    %36 = vector.load %arg4[%c0_5, %c0_6] : memref<16x128xf32, #tpu.memory_space<vmem>>, vector<16x128xf32>
    tpu.vector_store %arg4[%c0_5, %c0_6], %35 {strides = array<i32>} : memref<16x128xf32, #tpu.memory_space<vmem>>, vector<16x128xf32>,
    return
  }
  func.func @transform_0(%arg0: i32, %arg1: i32) -> (i32, i32) {
    %c0_i32 = arith.constant 0 : i32
    %c0_i32_0 = arith.constant 0 : i32
    return %arg0, %c0_i32 : i32, i32
  }
  func.func @transform_1(%arg0: i32, %arg1: i32) -> (i32, i32) {
    %c0_i32 = arith.constant 0 : i32
    %c0_i32_0 = arith.constant 0 : i32
    return %arg1, %c0_i32 : i32, i32
  }
  func.func @transform_2(%arg0: i32, %arg1: i32) -> (i32, i32) {
    %c0_i32 = arith.constant 0 : i32
    %c0_i32_0 = arith.constant 0 : i32
    return %arg0, %c0_i32 : i32, i32
  }
}

</mosaic_0001>

<llo_original>
// kernel: tpu_custom_call.1
$region0: #{tpu_custom_call.1}
  #allocation0 [shape = 'u32[]', space=smem, size = 0x4, offset = 0x4, fixed_abs, tag = 'smem constant byte address 0x4 - core index']
  #allocation1 [shape = 'u32[144,128]{1,0:T(1,128)}', space=vmem, size = 0x12000, scoped, tag = 'internal scratch']
  %s0 = inlined_call_operand.vmem [shape: s32[16,4], index: 0, kind: input, shape index: {}]
  %s1 = inlined_call_operand.hbm [shape: bf16[512,128], index: 1, kind: input, shape index: {}]
  %s2 = inlined_call_operand.hbm [shape: f32[16,128], index: 2, kind: output, shape index: {}]
  %s3 = sld [smem:[#allocation0]]
  $region22: #{tpu_custom_call.1} parent=0
    _
  %s5 = ssub.s32 1, %s3
  %s6 = scalar_select 0, %s5, %s3
  $region1: #{tpu_custom_call.1} parent=0
    #allocation2 [shape = 'u8[131072]{0}', space=vmem, size = 0x20000, scoped, tag = 'input window, operand 1, single buffered']
    #allocation3 [shape = 's32[1]{0}', space=sflag, size = 0x4, scoped, tag = 'scoped memory for tpu_custom_call.1']
    #allocation4 [shape = 's32[1]{0}', space=sflag, size = 0x4, scoped, tag = 'scoped memory for tpu_custom_call.1']
    #allocation5 [shape = 'u8[8192]{0}', space=vmem, size = 0x2000, scoped, tag = 'output window, operand 0, single buffered']
    %7 = vsyncpa [#allocation3], 0
    %8 = vsyncpa [#allocation4], 0
    // Predicated region
    $region2: #{tpu_custom_call.1} parent=1 // pred_check
      _
    $region3: #{tpu_custom_call.1} parent=1 // pred_check_branch
      %10 = sbr.rel (0) target = $region5
    $region4: #{tpu_custom_call.1} parent=1 // pred_region
      _
    $region5: #{tpu_custom_call.1} parent=1 // pred_fallthru
      _
    // Predicated region
    $region6: #{tpu_custom_call.1} parent=1 // pred_check
      _
    $region7: #{tpu_custom_call.1} parent=1 // pred_check_branch
      %12 = sbr.rel (0) target = $region9
    $region8: #{tpu_custom_call.1} parent=1 // pred_region
      %s14 = ssub.s32 4096, 4096
      %15 = vsyncadd [#allocation3], %s14
      %s16 = sshll.u32 [#allocation2], 4
      %s17 = int_to_ptr.vmem [resolvable:$true] %s16
      %22 = dma.hbm_to_vmem [thread:$0]  %s1, 4096, %s17, [#allocation3], 64, 64, 4
    $region9: #{tpu_custom_call.1} parent=1 // pred_fallthru
      _
    // Predicated region
    $region10: #{tpu_custom_call.1} parent=1 // pred_check
      _
    $region11: #{tpu_custom_call.1} parent=1 // pred_check_branch
      %24 = sbr.rel (0) target = $region13
    $region12: #{tpu_custom_call.1} parent=1 // pred_region
      %25 = dma.done [#allocation3], 4096
    $region13: #{tpu_custom_call.1} parent=1 // pred_fallthru
      _
    %v27 = vld [vmem:[%s0] sm:$0xff]
    %v28 = vld [vmem:[%s0 + $0x8] sm:$0xff]
    %v29 = vlaneseq
    %v30 = vand.u32 %v29, 127
    %v31 = vadd.s32 %v30, 128
    %v32 = vadd.s32 %v30, 256
    %v33 = vadd.s32 %v30, 384
    %34 = vset.pattern.permute.xlu0 0
    %35 = vperm.xlu0 %34, %v27
    %v36 = vpop.permute.xlu0 %35
    %37 = vset.pattern.permute.xlu0 0
    %38 = vperm.xlu0 %37, %v28
    %v39 = vpop.permute.xlu0 %38
    %vm40 = vcmp.eq.s32.totalorder %v36, %v30
    %vm41 = vcmp.eq.s32.totalorder %v36, %v31
    %vm42 = vcmp.eq.s32.totalorder %v36, %v32
    %vm43 = vcmp.eq.s32.totalorder %v36, %v33
    %vm44 = vcmp.eq.s32.totalorder %v39, %v30
    %vm45 = vcmp.eq.s32.totalorder %v39, %v31
    %vm46 = vcmp.eq.s32.totalorder %v39, %v32
    %vm47 = vcmp.eq.s32.totalorder %v39, %v33
    %v48 = vsel %vm40, 1, 0
    %v49 = vsel %vm41, 1, 0
    %v50 = vsel %vm42, 1, 0
    %v51 = vsel %vm43, 1, 0
    %v52 = vsel %vm44, 1, 0
    %v53 = vsel %vm45, 1, 0
    %v54 = vsel %vm46, 1, 0
    %v55 = vsel %vm47, 1, 0
    %v56 = vcvt.s32.f32 %v48
    %v57 = vcvt.s32.f32 %v49
    %v58 = vcvt.s32.f32 %v50
    %v59 = vcvt.s32.f32 %v51
    %v60 = vcvt.s32.f32 %v52
    %v61 = vcvt.s32.f32 %v53
    %v62 = vcvt.s32.f32 %v54
    %v63 = vcvt.s32.f32 %v55
    %v64 = vadd.f32 %v56, 0.0
    %v65 = vadd.f32 %v57, 0.0
    %v66 = vadd.f32 %v58, 0.0
    %v67 = vadd.f32 %v59, 0.0
    %v68 = vadd.f32 %v60, 0.0
    %v69 = vadd.f32 %v61, 0.0
    %v70 = vadd.f32 %v62, 0.0
    %v71 = vadd.f32 %v63, 0.0
    %72 = vset.pattern.permute.xlu0 1
    %73 = vperm.xlu0 %72, %v27
    %v74 = vpop.permute.xlu0 %73
    %75 = vset.pattern.permute.xlu0 1
    %76 = vperm.xlu0 %75, %v28
    %v77 = vpop.permute.xlu0 %76
    %vm78 = vcmp.eq.s32.totalorder %v74, %v30
    %vm79 = vcmp.eq.s32.totalorder %v74, %v31
    %vm80 = vcmp.eq.s32.totalorder %v74, %v32
    %vm81 = vcmp.eq.s32.totalorder %v74, %v33
    %vm82 = vcmp.eq.s32.totalorder %v77, %v30
    %vm83 = vcmp.eq.s32.totalorder %v77, %v31
    %vm84 = vcmp.eq.s32.totalorder %v77, %v32
    %vm85 = vcmp.eq.s32.totalorder %v77, %v33
    %v86 = vsel %vm78, 1, 0
    %v87 = vsel %vm79, 1, 0
    %v88 = vsel %vm80, 1, 0
    %v89 = vsel %vm81, 1, 0
    %v90 = vsel %vm82, 1, 0
    %v91 = vsel %vm83, 1, 0
    %v92 = vsel %vm84, 1, 0
    %v93 = vsel %vm85, 1, 0
    %v94 = vcvt.s32.f32 %v86
    %v95 = vcvt.s32.f32 %v87
    %v96 = vcvt.s32.f32 %v88
    %v97 = vcvt.s32.f32 %v89
    %v98 = vcvt.s32.f32 %v90
    %v99 = vcvt.s32.f32 %v91
    %v100 = vcvt.s32.f32 %v92
    %v101 = vcvt.s32.f32 %v93
    %v102 = vadd.f32 %v64, %v94
    %v103 = vadd.f32 %v65, %v95
    %v104 = vadd.f32 %v66, %v96
    %v105 = vadd.f32 %v67, %v97
    %v106 = vadd.f32 %v68, %v98
    %v107 = vadd.f32 %v69, %v99
    %v108 = vadd.f32 %v70, %v100
    %v109 = vadd.f32 %v71, %v101
    %110 = vset.pattern.permute.xlu0 2
    %111 = vperm.xlu0 %110, %v27
    %v112 = vpop.permute.xlu0 %111
    %113 = vset.pattern.permute.xlu0 2
    %114 = vperm.xlu0 %113, %v28
    %v115 = vpop.permute.xlu0 %114
    %vm116 = vcmp.eq.s32.totalorder %v112, %v30
    %vm117 = vcmp.eq.s32.totalorder %v112, %v31
    %vm118 = vcmp.eq.s32.totalorder %v112, %v32
    %vm119 = vcmp.eq.s32.totalorder %v112, %v33
    %vm120 = vcmp.eq.s32.totalorder %v115, %v30
    %vm121 = vcmp.eq.s32.totalorder %v115, %v31
    %vm122 = vcmp.eq.s32.totalorder %v115, %v32
    %vm123 = vcmp.eq.s32.totalorder %v115, %v33
    %v124 = vsel %vm116, 1, 0
    %v125 = vsel %vm117, 1, 0
    %v126 = vsel %vm118, 1, 0
    %v127 = vsel %vm119, 1, 0
    %v128 = vsel %vm120, 1, 0
    %v129 = vsel %vm121, 1, 0
    %v130 = vsel %vm122, 1, 0
    %v131 = vsel %vm123, 1, 0
    %v132 = vcvt.s32.f32 %v124
    %v133 = vcvt.s32.f32 %v125
    %v134 = vcvt.s32.f32 %v126
    %v135 = vcvt.s32.f32 %v127
    %v136 = vcvt.s32.f32 %v128
    %v137 = vcvt.s32.f32 %v129
    %v138 = vcvt.s32.f32 %v130
    %v139 = vcvt.s32.f32 %v131
    %v140 = vadd.f32 %v102, %v132
    %v141 = vadd.f32 %v103, %v133
    %v142 = vadd.f32 %v104, %v134
    %v143 = vadd.f32 %v105, %v135
    %v144 = vadd.f32 %v106, %v136
    %v145 = vadd.f32 %v107, %v137
    %v146 = vadd.f32 %v108, %v138
    %v147 = vadd.f32 %v109, %v139
    %148 = vset.pattern.permute.xlu0 3
    %149 = vperm.xlu0 %148, %v27
    %v150 = vpop.permute.xlu0 %149
    %151 = vset.pattern.permute.xlu0 3
    %152 = vperm.xlu0 %151, %v28
    %v153 = vpop.permute.xlu0 %152
    %vm154 = vcmp.eq.s32.totalorder %v150, %v30
    %vm155 = vcmp.eq.s32.totalorder %v150, %v31
    %vm156 = vcmp.eq.s32.totalorder %v150, %v32
    %vm157 = vcmp.eq.s32.totalorder %v150, %v33
    %vm158 = vcmp.eq.s32.totalorder %v153, %v30
    %vm159 = vcmp.eq.s32.totalorder %v153, %v31
    %vm160 = vcmp.eq.s32.totalorder %v153, %v32
    %vm161 = vcmp.eq.s32.totalorder %v153, %v33
    %v162 = vsel %vm154, 1, 0
    %v163 = vsel %vm155, 1, 0
    %v164 = vsel %vm156, 1, 0
    %v165 = vsel %vm157, 1, 0
    %v166 = vsel %vm158, 1, 0
    %v167 = vsel %vm159, 1, 0
    %v168 = vsel %vm160, 1, 0
    %v169 = vsel %vm161, 1, 0
    %v170 = vcvt.s32.f32 %v162
    %v171 = vcvt.s32.f32 %v163
    %v172 = vcvt.s32.f32 %v164
    %v173 = vcvt.s32.f32 %v165
    %v174 = vcvt.s32.f32 %v166
    %v175 = vcvt.s32.f32 %v167
    %v176 = vcvt.s32.f32 %v168
    %v177 = vcvt.s32.f32 %v169
    %v178 = vadd.f32 %v140, %v170
    %v179 = vadd.f32 %v141, %v171
    %v180 = vadd.f32 %v142, %v172
    %v181 = vadd.f32 %v143, %v173
    %v182 = vadd.f32 %v144, %v174
    %v183 = vadd.f32 %v145, %v175
    %v184 = vadd.f32 %v146, %v176
    %v185 = vadd.f32 %v147, %v177
    %v186 = vpack.c.bf16 %v182, %v178
    %v187 = vpack.c.bf16 %v183, %v179
    %v188 = vpack.c.bf16 %v184, %v180
    %v189 = vpack.c.bf16 %v185, %v181
    %v190 = vld [vmem:[#allocation2] sm:$0xf]
    %v191 = vld [vmem:[#allocation2 + $0x4] sm:$0xf]
    %v192 = vld [vmem:[#allocation2 + $0x8] sm:$0xf]
    %v193 = vld [vmem:[#allocation2 + $0xc] sm:$0xf]
    %v194 = vld [vmem:[#allocation2 + $0x10] sm:$0xf]
    %v195 = vld [vmem:[#allocation2 + $0x14] sm:$0xf]
    %v196 = vld [vmem:[#allocation2 + $0x18] sm:$0xf]
    %v197 = vld [vmem:[#allocation2 + $0x1c] sm:$0xf]
    %v198 = vld [vmem:[#allocation2 + $0x20] sm:$0xf]
    %v199 = vld [vmem:[#allocation2 + $0x24] sm:$0xf]
    %v200 = vld [vmem:[#allocation2 + $0x28] sm:$0xf]
    %v201 = vld [vmem:[#allocation2 + $0x2c] sm:$0xf]
    %v202 = vld [vmem:[#allocation2 + $0x30] sm:$0xf]
    %v203 = vld [vmem:[#allocation2 + $0x34] sm:$0xf]
    %v204 = vld [vmem:[#allocation2 + $0x38] sm:$0xf]
    %v205 = vld [vmem:[#allocation2 + $0x3c] sm:$0xf]
    %v206 = vld [vmem:[#allocation2 + $0x40] sm:$0xf]
    %v207 = vld [vmem:[#allocation2 + $0x44] sm:$0xf]
    %v208 = vld [vmem:[#allocation2 + $0x48] sm:$0xf]
    %v209 = vld [vmem:[#allocation2 + $0x4c] sm:$0xf]
    %v210 = vld [vmem:[#allocation2 + $0x50] sm:$0xf]
    %v211 = vld [vmem:[#allocation2 + $0x54] sm:$0xf]
    %v212 = vld [vmem:[#allocation2 + $0x58] sm:$0xf]
    %v213 = vld [vmem:[#allocation2 + $0x5c] sm:$0xf]
    %v214 = vld [vmem:[#allocation2 + $0x60] sm:$0xf]
    %v215 = vld [vmem:[#allocation2 + $0x64] sm:$0xf]
    %v216 = vld [vmem:[#allocation2 + $0x68] sm:$0xf]
    %v217 = vld [vmem:[#allocation2 + $0x6c] sm:$0xf]
    %v218 = vld [vmem:[#allocation2 + $0x70] sm:$0xf]
    %v219 = vld [vmem:[#allocation2 + $0x74] sm:$0xf]
    %v220 = vld [vmem:[#allocation2 + $0x78] sm:$0xf]
    %v221 = vld [vmem:[#allocation2 + $0x7c] sm:$0xf]
    %v222 = vld [vmem:[#allocation2 + $0x80] sm:$0xf]
    %v223 = vld [vmem:[#allocation2 + $0x84] sm:$0xf]
    %v224 = vld [vmem:[#allocation2 + $0x88] sm:$0xf]
    %v225 = vld [vmem:[#allocation2 + $0x8c] sm:$0xf]
    %v226 = vld [vmem:[#allocation2 + $0x90] sm:$0xf]
    %v227 = vld [vmem:[#allocation2 + $0x94] sm:$0xf]
    %v228 = vld [vmem:[#allocation2 + $0x98] sm:$0xf]
    %v229 = vld [vmem:[#allocation2 + $0x9c] sm:$0xf]
    %v230 = vld [vmem:[#allocation2 + $0xa0] sm:$0xf]
    %v231 = vld [vmem:[#allocation2 + $0xa4] sm:$0xf]
    %v232 = vld [vmem:[#allocation2 + $0xa8] sm:$0xf]
    %v233 = vld [vmem:[#allocation2 + $0xac] sm:$0xf]
    %v234 = vld [vmem:[#allocation2 + $0xb0] sm:$0xf]
    %v235 = vld [vmem:[#allocation2 + $0xb4] sm:$0xf]
    %v236 = vld [vmem:[#allocation2 + $0xb8] sm:$0xf]
    %v237 = vld [vmem:[#allocation2 + $0xbc] sm:$0xf]
    %v238 = vld [vmem:[#allocation2 + $0xc0] sm:$0xf]
    %v239 = vld [vmem:[#allocation2 + $0xc4] sm:$0xf]
    %v240 = vld [vmem:[#allocation2 + $0xc8] sm:$0xf]
    %v241 = vld [vmem:[#allocation2 + $0xcc] sm:$0xf]
    %v242 = vld [vmem:[#allocation2 + $0xd0] sm:$0xf]
    %v243 = vld [vmem:[#allocation2 + $0xd4] sm:$0xf]
    %v244 = vld [vmem:[#allocation2 + $0xd8] sm:$0xf]
    %v245 = vld [vmem:[#allocation2 + $0xdc] sm:$0xf]
    %v246 = vld [vmem:[#allocation2 + $0xe0] sm:$0xf]
    %v247 = vld [vmem:[#allocation2 + $0xe4] sm:$0xf]
    %v248 = vld [vmem:[#allocation2 + $0xe8] sm:$0xf]
    %v249 = vld [vmem:[#allocation2 + $0xec] sm:$0xf]
    %v250 = vld [vmem:[#allocation2 + $0xf0] sm:$0xf]
    %v251 = vld [vmem:[#allocation2 + $0xf4] sm:$0xf]
    %v252 = vld [vmem:[#allocation2 + $0xf8] sm:$0xf]
    %v253 = vld [vmem:[#allocation2 + $0xfc] sm:$0xf]
    %v318 = vunpack.c.l.b16 %v190
    %v319 = vunpack.c.l.b16 %v191
    %v320 = vunpack.c.l.b16 %v192
    %v321 = vunpack.c.l.b16 %v193
    %v322 = vunpack.c.l.b16 %v194
    %v323 = vunpack.c.l.b16 %v195
    %v324 = vunpack.c.l.b16 %v196
    %v325 = vunpack.c.l.b16 %v197
    %v326 = vunpack.c.l.b16 %v198
    %v327 = vunpack.c.l.b16 %v199
    %v328 = vunpack.c.l.b16 %v200
    %v329 = vunpack.c.l.b16 %v201
    %v330 = vunpack.c.l.b16 %v202
    %v331 = vunpack.c.l.b16 %v203
    %v332 = vunpack.c.l.b16 %v204
    %v333 = vunpack.c.l.b16 %v205
    %v334 = vunpack.c.l.b16 %v206
    %v335 = vunpack.c.l.b16 %v207
    %v336 = vunpack.c.l.b16 %v208
    %v337 = vunpack.c.l.b16 %v209
    %v338 = vunpack.c.l.b16 %v210
    %v339 = vunpack.c.l.b16 %v211
    %v340 = vunpack.c.l.b16 %v212
    %v341 = vunpack.c.l.b16 %v213
    %v342 = vunpack.c.l.b16 %v214
    %v343 = vunpack.c.l.b16 %v215
    %v344 = vunpack.c.l.b16 %v216
    %v345 = vunpack.c.l.b16 %v217
    %v346 = vunpack.c.l.b16 %v218
    %v347 = vunpack.c.l.b16 %v219
    %v348 = vunpack.c.l.b16 %v220
    %v349 = vunpack.c.l.b16 %v221
    %v350 = vunpack.c.l.b16 %v222
    %v351 = vunpack.c.l.b16 %v223
    %v352 = vunpack.c.l.b16 %v224
    %v353 = vunpack.c.l.b16 %v225
    %v354 = vunpack.c.l.b16 %v226
    %v355 = vunpack.c.l.b16 %v227
    %v356 = vunpack.c.l.b16 %v228
    %v357 = vunpack.c.l.b16 %v229
    %v358 = vunpack.c.l.b16 %v230
    %v359 = vunpack.c.l.b16 %v231
    %v360 = vunpack.c.l.b16 %v232
    %v361 = vunpack.c.l.b16 %v233
    %v362 = vunpack.c.l.b16 %v234
    %v363 = vunpack.c.l.b16 %v235
    %v364 = vunpack.c.l.b16 %v236
    %v365 = vunpack.c.l.b16 %v237
    %v366 = vunpack.c.l.b16 %v238
    %v367 = vunpack.c.l.b16 %v239
    %v368 = vunpack.c.l.b16 %v240
    %v369 = vunpack.c.l.b16 %v241
    %v370 = vunpack.c.l.b16 %v242
    %v371 = vunpack.c.l.b16 %v243
    %v372 = vunpack.c.l.b16 %v244
    %v373 = vunpack.c.l.b16 %v245
    %v374 = vunpack.c.l.b16 %v246
    %v375 = vunpack.c.l.b16 %v247
    %v376 = vunpack.c.l.b16 %v248
    %v377 = vunpack.c.l.b16 %v249
    %v378 = vunpack.c.l.b16 %v250
    %v379 = vunpack.c.l.b16 %v251
    %v380 = vunpack.c.l.b16 %v252
    %v381 = vunpack.c.l.b16 %v253
    %v382 = vpack.c.b16 %v319, %v318
    %v383 = vpack.c.b16 %v321, %v320
    %v384 = vpack.c.b16 %v323, %v322
    %v385 = vpack.c.b16 %v325, %v324
    %v386 = vpack.c.b16 %v327, %v326
    %v387 = vpack.c.b16 %v329, %v328
    %v388 = vpack.c.b16 %v331, %v330
    %v389 = vpack.c.b16 %v333, %v332
    %v390 = vpack.c.b16 %v335, %v334
    %v391 = vpack.c.b16 %v337, %v336
    %v392 = vpack.c.b16 %v339, %v338
    %v393 = vpack.c.b16 %v341, %v340
    %v394 = vpack.c.b16 %v343, %v342
    %v395 = vpack.c.b16 %v345, %v344
    %v396 = vpack.c.b16 %v347, %v346
    %v397 = vpack.c.b16 %v349, %v348
    %v398 = vpack.c.b16 %v351, %v350
    %v399 = vpack.c.b16 %v353, %v352
    %v400 = vpack.c.b16 %v355, %v354
    %v401 = vpack.c.b16 %v357, %v356
    %v402 = vpack.c.b16 %v359, %v358
    %v403 = vpack.c.b16 %v361, %v360
    %v404 = vpack.c.b16 %v363, %v362
    %v405 = vpack.c.b16 %v365, %v364
    %v406 = vpack.c.b16 %v367, %v366
    %v407 = vpack.c.b16 %v369, %v368
    %v408 = vpack.c.b16 %v371, %v370
    %v409 = vpack.c.b16 %v373, %v372
    %v410 = vpack.c.b16 %v375, %v374
    %v411 = vpack.c.b16 %v377, %v376
    %v412 = vpack.c.b16 %v379, %v378
    %v413 = vpack.c.b16 %v381, %v380
    %446 = vmatprep.subr.bf16.mxu0 0
    %447 = vmatpush1.bf16.msra.mxu0 %v382
    %448 = vmatprep.subr.bf16.mxu0 0
    %449 = vmatpush1.bf16.msra.mxu0 %v383
    %450 = vmatprep.subr.bf16.mxu0 0
    %451 = vmatpush1.bf16.msra.mxu0 %v384
    %452 = vmatprep.subr.bf16.mxu0 0
    %453 = vmatpush1.bf16.msra.mxu0 %v385
    %454 = vmatprep.subr.bf16.mxu0 0
    %455 = vmatpush1.bf16.msra.mxu0 %v386
    %456 = vmatprep.subr.bf16.mxu0 0
    %457 = vmatpush1.bf16.msra.mxu0 %v387
    %458 = vmatprep.subr.bf16.mxu0 0
    %459 = vmatpush1.bf16.msra.mxu0 %v388
    %460 = vmatprep.subr.bf16.mxu0 0
    %461 = vmatpush1.bf16.msra.mxu0 %v389
    %462 = vmatprep.subr.bf16.mxu0 0
    %463 = vmatpush1.bf16.msra.mxu0 %v390
    %464 = vmatprep.subr.bf16.mxu0 0
    %465 = vmatpush1.bf16.msra.mxu0 %v391
    %466 = vmatprep.subr.bf16.mxu0 0
    %467 = vmatpush1.bf16.msra.mxu0 %v392
    %468 = vmatprep.subr.bf16.mxu0 0
    %469 = vmatpush1.bf16.msra.mxu0 %v393
    %470 = vmatprep.subr.bf16.mxu0 0
    %471 = vmatpush1.bf16.msra.mxu0 %v394
    %472 = vmatprep.subr.bf16.mxu0 0
    %473 = vmatpush1.bf16.msra.mxu0 %v395
    %474 = vmatprep.subr.bf16.mxu0 0
    %475 = vmatpush1.bf16.msra.mxu0 %v396
    %476 = vmatprep.subr.bf16.mxu0 0
    %477 = vmatpush1.bf16.msra.mxu0 %v397
    %478 = vmatprep.mubr.bf16.mxu0 %v187
    %479 = vmatmul.mubr.bf16.gmra.mrb[0].mxu0 %v186
    %v480 = vpop.f32.mrb[0].mxu0
    %v481 = vadd.f32 0.0, %v480
    %v482 = vpop.f32.mrb[0].mxu0
    %v483 = vpop.f32.mrb[0].mxu0
    %v484 = vadd.f32 0.0, %v483
    %v485 = vpop.f32.mrb[0].mxu0
    %486 = vdwg.mxu0
    %487 = vmatprep.subr.bf16.mxu0 0
    %488 = vmatpush1.bf16.msra.mxu0 %v398
    %489 = vmatprep.subr.bf16.mxu0 0
    %490 = vmatpush1.bf16.msra.mxu0 %v399
    %491 = vmatprep.subr.bf16.mxu0 0
    %492 = vmatpush1.bf16.msra.mxu0 %v400
    %493 = vmatprep.subr.bf16.mxu0 0
    %494 = vmatpush1.bf16.msra.mxu0 %v401
    %495 = vmatprep.subr.bf16.mxu0 0
    %496 = vmatpush1.bf16.msra.mxu0 %v402
    %497 = vmatprep.subr.bf16.mxu0 0
    %498 = vmatpush1.bf16.msra.mxu0 %v403
    %499 = vmatprep.subr.bf16.mxu0 0
    %500 = vmatpush1.bf16.msra.mxu0 %v404
    %501 = vmatprep.subr.bf16.mxu0 0
    %502 = vmatpush1.bf16.msra.mxu0 %v405
    %503 = vmatprep.subr.bf16.mxu0 0
    %504 = vmatpush1.bf16.msra.mxu0 %v406
    %505 = vmatprep.subr.bf16.mxu0 0
    %506 = vmatpush1.bf16.msra.mxu0 %v407
    %507 = vmatprep.subr.bf16.mxu0 0
    %508 = vmatpush1.bf16.msra.mxu0 %v408
    %509 = vmatprep.subr.bf16.mxu0 0
    %510 = vmatpush1.bf16.msra.mxu0 %v409
    %511 = vmatprep.subr.bf16.mxu0 0
    %512 = vmatpush1.bf16.msra.mxu0 %v410
    %513 = vmatprep.subr.bf16.mxu0 0
    %514 = vmatpush1.bf16.msra.mxu0 %v411
    %515 = vmatprep.subr.bf16.mxu0 0
    %516 = vmatpush1.bf16.msra.mxu0 %v412
    %517 = vmatprep.subr.bf16.mxu0 0
    %518 = vmatpush1.bf16.msra.mxu0 %v413
    %519 = vmatprep.mubr.bf16.mxu0 %v189
    %520 = vmatmul.mubr.bf16.gmra.mrb[0].mxu0 %v188
    %v521 = vpop.f32.mrb[0].mxu0
    %v522 = vadd.f32 %v481, %v521
    %v523 = vpop.f32.mrb[0].mxu0
    %v524 = vpop.f32.mrb[0].mxu0
    %v525 = vadd.f32 %v484, %v524
    %v526 = vpop.f32.mrb[0].mxu0
    %527 = vdwg.mxu0
    %v528 = vmul.f32 %v522, 0.25
    %v529 = vmul.f32 %v525, 0.25
    %530 = vst [vmem:[#allocation5] sm:$0xff] %v528
    %531 = vst [vmem:[#allocation5 + $0x8] sm:$0xff] %v529
    // Predicated region
    $region14: #{tpu_custom_call.1} parent=1 // pred_check
      _
    $region15: #{tpu_custom_call.1} parent=1 // pred_check_branch
      %533 = sbr.rel (0) target = $region17
    $region16: #{tpu_custom_call.1} parent=1 // pred_region
      %s535 = ssub.s32 256, 256
      %536 = vsyncadd [#allocation4], %s535
      %s537 = sshll.u32 [#allocation5], 4
      %s538 = int_to_ptr.vmem [resolvable:$true] %s537
      %543 = dma.vmem_to_hbm [thread:$0]  %s538, 256, %s2, [#allocation4], 128, 128, 8
    $region17: #{tpu_custom_call.1} parent=1 // pred_fallthru
      _
    // Predicated region
    $region18: #{tpu_custom_call.1} parent=1 // pred_check
      _
    $region19: #{tpu_custom_call.1} parent=1 // pred_check_branch
      %545 = sbr.rel (0) target = $region21
    $region20: #{tpu_custom_call.1} parent=1 // pred_region
      %546 = dma.done [#allocation4], 256
    $region21: #{tpu_custom_call.1} parent=1 // pred_fallthru
      _
    %547 = vsyncpa [#allocation3], 1
    %548 = vsyncpa [#allocation4], 1

</llo_original>
